<compile_context>
chip_gen: v7x
topology: tpu7x:2x2x1
jax: 0.10.0
libtpu: 0.0.40
codegen_flags: <defaults>
</compile_context>

<pallas_src>
import functools
import math

import jax
import jax.numpy as jnp
from jax.experimental import pallas as pl
from jax.experimental.pallas import tpu as pltpu

# murmur3-style 32-bit mixing constants (expressed as int32).
_MIX1 = -1640531527   # 0x9E3779B9
_MIX2 = -2048144789   # 0x85EBCA6B
_MIX3 = -1028477387   # 0xC2B2AE35


def _hash_bits(shape, key):
  """Counter-based per-element pseudo-random int32 bits.

  Pure VPU integer ops (iota / mul / xor / shift), so it lowers on real TPUs
  and under the CPU interpreter alike (unlike pltpu.prng_*).  Arithmetic right
  shifts are sufficient here: each of the 23 bits consumed downstream is an
  XOR of independently pseudo-random bits.
  """
  i0 = jax.lax.broadcasted_iota(jnp.int32, shape, 0)
  i1 = jax.lax.broadcasted_iota(jnp.int32, shape, 1)
  x = i0 * jnp.int32(_MIX1) + i1 * jnp.int32(_MIX2) + key
  x = (x ^ (x >> 15)) * jnp.int32(_MIX2)
  x = (x ^ (x >> 13)) * jnp.int32(_MIX3)
  return x ^ (x >> 16)


def _dropout(h, seed, layer, rate):
  """ESPnet Tacotron-prenet dropout (always active): Bernoulli(1-rate)/(1-rate).

  Integer-domain keep test against a precomputed threshold; the scale is a
  compile-time constant.
  """
  if rate <= 0.0:
    return h
  threshold = jnp.int32(int(rate * float(1 << 23)))
  scale = jnp.float32(1.0 / (1.0 - rate))
  key = (seed
         + pl.program_id(0) * jnp.int32(_MIX2)      # time tile
         + pl.program_id(1) * jnp.int32(_MIX3)      # batch row
         + jnp.int32(layer + 1) * jnp.int32(_MIX1)) # prenet layer
  bits = _hash_bits(h.shape, key)
  keep = (bits & jnp.int32(0x007FFFFF)) >= threshold
  return jnp.where(keep, h * scale, jnp.float32(0.0))


def speech_decoder_prenet_kernel(
    # scalar prefetch (SMEM)
    seed_ref,     # (1,) int32
    # VMEM inputs
    x_ref,        # (tile_t, odim)   batch dim squeezed
    w0_ref,       # (odim, units)
    b0_ref,       # (1, units)
    w1_ref,       # (units, units)
    b1_ref,       # (1, units)
    wf_ref,       # (units, D)       fused  wp @ wsx
    add_ref,      # (tile_t, D)      (bp + alpha*pe) @ wsx + bs   (time block)
    spk_ref,      # (1, D)           normalize(spkembs[b]) @ wss  (batch block)
    # output
    out_ref,      # (tile_t, D)      batch dim squeezed, lane-dense (D % 128 == 0)
    *, dropout_rate):
  seed = seed_ref[0]

  # Tacotron decoder prenet: 2 x (Linear -> ReLU -> always-on dropout),
  # batched over the whole time tile (one MXU push per layer per tile).
  h = jnp.dot(x_ref[...], w0_ref[...],
              preferred_element_type=jnp.float32) + b0_ref[...]
  h = _dropout(jnp.maximum(h, 0.0), seed, 0, dropout_rate)
  h = jnp.dot(h, w1_ref[...],
              preferred_element_type=jnp.float32) + b1_ref[...]
  h = _dropout(jnp.maximum(h, 0.0), seed, 1, dropout_rate)

  # Fused: projection Linear + scaled positional encoding + speaker Linear
  #   relu( h @ (wp@wsx) + [(bp + alpha*pe)@wsx + bs] + normalize(s)@wss )
  o = (jnp.dot(h, wf_ref[...], preferred_element_type=jnp.float32)
       + add_ref[...] + spk_ref[...])
  out_ref[...] = jnp.maximum(o, 0.0).astype(out_ref.dtype)


def speech_decoder_prenet(prev_output_tokens, tgt_lengths, spkembs, params,
                          *, dropout_rate, seed, tile_t=None,
                          out_dtype=jnp.float32):
  """Forward of SpeechDecoderPrenet (dprenet path + 'pre' spk integration).

  Returns (out [B,T,D], tgt_frames_mask [B,T] bool) — mask is True on pads
  (== ~make_non_pad_mask(tgt_lengths)).
  """
  x = prev_output_tokens.astype(jnp.float32)
  B, T, odim = x.shape
  units = params["w0"].shape[1]
  D = params["wp"].shape[1]
  assert D % 128 == 0, "decoder_embed_dim must be a multiple of 128"

  # Time tile: >=1024-row tiles sit near the HBM roofline; per-grid-step
  # overhead (~0.35 us) and weight-block prologues amortize away.
  if tile_t is None:
    tile_t = T if T <= 1024 else 1024
  tile_t = min(tile_t, T)
  if tile_t != T:
    tile_t = max(8, (tile_t // 8) * 8)        # keep the sublane dim aligned
  num_t = -(-T // tile_t)
  T_pad = num_t * tile_t

  # ---- tiny wrapper-side parameter preprocessing (algebraic fusion) ----
  alpha = params["alpha"][0]
  wf = params["wp"] @ params["wsx"]                                 # (units, D)
  pe_add = ((params["bp"] + alpha * params["pe"][:T]) @ params["wsx"]
            + params["bs"])                                         # (T, D)
  # Speaker branch: F.normalize(spkembs, p=2, eps=1e-12) projected through the
  # spk-half of the concat Linear (only B*D floats — precomputed here).
  nrm = jnp.sqrt(jnp.sum(spkembs * spkembs, axis=-1, keepdims=True))
  s_c = (spkembs / jnp.maximum(nrm, 1e-12)) @ params["wss"]         # (B, D)
  s_c = s_c.reshape(B, 1, D)                   # per-batch (1, D) block

  if T_pad != T:   # zero-pad the time axis; padded rows are sliced off below
    x = jnp.pad(x, ((0, 0), (0, T_pad - T), (0, 0)))
    pe_add = jnp.pad(pe_add, ((0, T_pad - T), (0, 0)))

  seed_arr = jnp.asarray([seed], dtype=jnp.int32)
  kernel = functools.partial(speech_decoder_prenet_kernel,
                             dropout_rate=float(dropout_rate))

  # Grid = (time tiles, batch), batch innermost: the pe_add block index (t, 0)
  # is constant across the inner loop, so Pallas fetches it once per time tile
  # instead of B times.  With small B, the outer time axis also carries the
  # v7x megacore parallelism.
  out = pl.pallas_call(
      kernel,
      out_shape=jax.ShapeDtypeStruct((B, T_pad, D), out_dtype),
      grid_spec=pltpu.PrefetchScalarGridSpec(
          num_scalar_prefetch=1,
          grid=(num_t, B),
          in_specs=[
              pl.BlockSpec((None, tile_t, odim), lambda t, b, seed: (b, t, 0)),
              pl.BlockSpec((odim, units), lambda t, b, seed: (0, 0)),
              pl.BlockSpec((1, units), lambda t, b, seed: (0, 0)),
              pl.BlockSpec((units, units), lambda t, b, seed: (0, 0)),
              pl.BlockSpec((1, units), lambda t, b, seed: (0, 0)),
              pl.BlockSpec((units, D), lambda t, b, seed: (0, 0)),
              pl.BlockSpec((tile_t, D), lambda t, b, seed: (t, 0)),
              pl.BlockSpec((None, 1, D), lambda t, b, seed: (b, 0, 0)),
          ],
          out_specs=pl.BlockSpec((None, tile_t, D),
                                 lambda t, b, seed: (b, t, 0)),
      ),
      compiler_params=pltpu.CompilerParams(
          dimension_semantics=("parallel", "parallel")),
  )(seed_arr, x, params["w0"], params["b0"], params["w1"], params["b1"],
    wf, pe_add, s_c)

  if T_pad != T:
    out = out[:, :T]

  # Padding mask in plain JAX: True where t >= length
  # (== ~make_non_pad_mask(tgt_lengths)).
  t_idx = jnp.arange(T, dtype=jnp.int32)[None, :]
  tgt_frames_mask = t_idx >= tgt_lengths.astype(jnp.int32)[:, None]
  return out, tgt_frames_mask


def speech_decoder_prenet_reference(x, tgt_lengths, spkembs, params):
  """Pure-JAX reference (dropout disabled), mirroring the PyTorch module."""
  # TODO(synk): ScaledPositionalEncoding's nn.Dropout (positional dropout) is
  # modeled as eval-mode identity in both the reference and the kernel.
  T = x.shape[1]
  h = jnp.maximum(x @ params["w0"] + params["b0"], 0.0)
  h = jnp.maximum(h @ params["w1"] + params["b1"], 0.0)
  h = h @ params["wp"] + params["bp"]
  h = h + params["alpha"][0] * params["pe"][:T][None]
  nrm = jnp.sqrt(jnp.sum(spkembs * spkembs, axis=-1, keepdims=True))
  s = spkembs / jnp.maximum(nrm, 1e-12)
  o = jnp.maximum(h @ params["wsx"] + (s @ params["wss"])[:, None, :]
                  + params["bs"], 0.0)
  mask = jnp.arange(T)[None, :] >= tgt_lengths[:, None]
  return o, mask


def init_params(key, odim, units, D, spk_dim, max_len):
  keys = jax.random.split(key, 4)

  def linear(k, fan_in, fan_out):
    wk, bk = jax.random.split(k)
    bound = 1.0 / math.sqrt(fan_in)
    w = jax.random.uniform(wk, (fan_in, fan_out), jnp.float32, -bound, bound)
    b = jax.random.uniform(bk, (1, fan_out), jnp.float32, -bound, bound)
    return w, b

  w0, b0 = linear(keys[0], odim, units)            # prenet layer 0
  w1, b1 = linear(keys[1], units, units)           # prenet layer 1
  wp, bp = linear(keys[2], units, D)               # Linear(units -> embed_dim)
  wspk, bs = linear(keys[3], D + spk_dim, D)       # spkembs_layer Linear
  wsx, wss = wspk[:D], wspk[D:]                    # concat split: x part / spk part

  # sinusoidal positional table (ESPnet PositionalEncoding.extend_pe), D even
  pos = jnp.arange(max_len, dtype=jnp.float32)[:, None]
  div = jnp.exp(jnp.arange(0, D, 2, dtype=jnp.float32)
                * -(math.log(10000.0) / D))
  pe = jnp.zeros((max_len, D), jnp.float32)
  pe = pe.at[:, 0::2].set(jnp.sin(pos * div))
  pe = pe.at[:, 1::2].set(jnp.cos(pos * div))

  alpha = jnp.ones((1,), jnp.float32)              # ScaledPositionalEncoding.alpha

  return dict(w0=w0, b0=b0, w1=w1, b1=b1, wp=wp, bp=bp,
              wsx=wsx, wss=wss, bs=bs, pe=pe, alpha=alpha)


if __name__ == "__main__":
  B, T = 2, 8
  odim, units, D, spk_dim = 8, 32, 128, 16
  dprenet_dropout_rate = 0.5

  key = jax.random.PRNGKey(0)
  k_x, k_spk, k_par = jax.random.split(key, 3)

  prev_output_tokens = jax.random.normal(k_x, (B, T, odim), jnp.float32)
  spkembs = jax.random.normal(k_spk, (B, spk_dim), jnp.float32)
  tgt_lengths = jnp.array([8, 5], jnp.int32)

  params = init_params(k_par, odim, units, D, spk_dim, max_len=T)

  # 1) numerics check vs pure-JAX reference with dropout disabled
  #    (exercises the fused wp@wsx / pe / speaker path deterministically).
  out_nd, mask_nd = speech_decoder_prenet(
      prev_output_tokens, tgt_lengths, spkembs, params,
      dropout_rate=0.0, seed=0)
  ref_out, ref_mask = speech_decoder_prenet_reference(
      prev_output_tokens, tgt_lengths, spkembs, params)
  jax.block_until_ready((out_nd, mask_nd))
  assert out_nd.shape == (B, T, D) and mask_nd.shape == (B, T)
  assert bool(jnp.all(mask_nd == ref_mask))
  assert bool(jnp.allclose(out_nd, ref_out, atol=1e-4, rtol=1e-4))

  # 2) full forward with always-on Tacotron-prenet dropout (in-kernel hash RNG);
  #    the draw is deterministic for a fixed seed.
  out_a, tgt_frames_mask = speech_decoder_prenet(
      prev_output_tokens, tgt_lengths, spkembs, params,
      dropout_rate=dprenet_dropout_rate, seed=1234)
  out_b, _ = speech_decoder_prenet(
      prev_output_tokens, tgt_lengths, spkembs, params,
      dropout_rate=dprenet_dropout_rate, seed=1234)
  jax.block_until_ready((out_a, out_b, tgt_frames_mask))
  assert out_a.shape == (B, T, D) and tgt_frames_mask.shape == (B, T)
  assert tgt_frames_mask.dtype == jnp.bool_
  assert bool(jnp.all(jnp.isfinite(out_a)))
  assert bool(jnp.array_equal(out_a, out_b))
  print("KERNEL_OK")
</pallas_src>

<mosaic_0001>
module attributes {stable_mosaic.version = 11 : i64} {
  func.func @speech_decoder_prenet_kernel(%arg0: i32, %arg1: i32, %arg2: memref<1xi32, #tpu.memory_space<smem>>, %arg3: memref<1x8x8xf32, #tpu.memory_space<vmem>>, %arg4: memref<8x32xf32, #tpu.memory_space<vmem>>, %arg5: memref<1x32xf32, #tpu.memory_space<vmem>>, %arg6: memref<32x32xf32, #tpu.memory_space<vmem>>, %arg7: memref<1x32xf32, #tpu.memory_space<vmem>>, %arg8: memref<32x128xf32, #tpu.memory_space<vmem>>, %arg9: memref<8x128xf32, #tpu.memory_space<vmem>>, %arg10: memref<1x1x128xf32, #tpu.memory_space<vmem>>, %arg11: memref<1x8x128xf32, #tpu.memory_space<vmem>>) attributes {dimension_semantics = [#tpu.dimension_semantics<parallel>, #tpu.dimension_semantics<parallel>], iteration_bounds = array<i64: 1, 2>, scalar_prefetch = 1 : i64, scratch_operands = 0 : i64, tpu.core_type = #tpu.core_type<tc>, window_params = [{transform_indices = @transform_0, window_bounds = array<i64: 1, 8, 8>}, {pipeline_mode = #tpu.pipeline_mode<synchronous>, transform_indices = @transform_1, window_bounds = array<i64: 8, 32>}, {pipeline_mode = #tpu.pipeline_mode<synchronous>, transform_indices = @transform_2, window_bounds = array<i64: 1, 32>}, {pipeline_mode = #tpu.pipeline_mode<synchronous>, transform_indices = @transform_3, window_bounds = array<i64: 32, 32>}, {pipeline_mode = #tpu.pipeline_mode<synchronous>, transform_indices = @transform_4, window_bounds = array<i64: 1, 32>}, {pipeline_mode = #tpu.pipeline_mode<synchronous>, transform_indices = @transform_5, window_bounds = array<i64: 32, 128>}, {transform_indices = @transform_6, window_bounds = array<i64: 8, 128>}, {transform_indices = @transform_7, window_bounds = array<i64: 1, 1, 128>}, {transform_indices = @transform_8, window_bounds = array<i64: 1, 8, 128>}]} {
    %c0 = arith.constant 0 : index
    %c0_0 = arith.constant 0 : index
    %c0_1 = arith.constant 0 : index
    %0 = vector.load %arg3[%c0, %c0_0, %c0_1] : memref<1x8x8xf32, #tpu.memory_space<vmem>>, vector<1x8x8xf32>
    %1 = vector.shape_cast %0 : vector<1x8x8xf32> to vector<8x8xf32>
    %c0_2 = arith.constant 0 : index
    %c0_3 = arith.constant 0 : index
    %2 = vector.load %arg4[%c0_2, %c0_3] : memref<8x32xf32, #tpu.memory_space<vmem>>, vector<8x32xf32>
    %cst = arith.constant dense<0.000000e+00> : vector<8x32xf32>
    %3 = tpu.matmul %1, %2, %cst {dimension_numbers = #tpu.dot_dimension_numbers<[1], [0], [0], [1], [0, 0, 1, 1], [], []>} : vector<8x8xf32>, vector<8x32xf32>, vector<8x32xf32> -> vector<8x32xf32>
    %c0_4 = arith.constant 0 : index
    %c0_5 = arith.constant 0 : index
    %4 = vector.load %arg5[%c0_4, %c0_5] : memref<1x32xf32, #tpu.memory_space<vmem>>, vector<1x32xf32>
    %5 = vector.broadcast %4 : vector<1x32xf32> to vector<8x32xf32>
    %6 = arith.addf %3, %5 : vector<8x32xf32>
    %cst_6 = arith.constant 0.000000e+00 : f32
    %7 = vector.broadcast %cst_6 : f32 to vector<8x32xf32>
    %8 = arith.maximumf %6, %7 : vector<8x32xf32>
    %c0_7 = arith.constant 0 : index
    %c0_8 = arith.constant 0 : index
    %9 = vector.load %arg6[%c0_7, %c0_8] : memref<32x32xf32, #tpu.memory_space<vmem>>, vector<32x32xf32>
    %cst_9 = arith.constant dense<0.000000e+00> : vector<8x32xf32>
    %10 = tpu.matmul %8, %9, %cst_9 {dimension_numbers = #tpu.dot_dimension_numbers<[1], [0], [0], [1], [0, 0, 1, 1], [], []>} : vector<8x32xf32>, vector<32x32xf32>, vector<8x32xf32> -> vector<8x32xf32>
    %c0_10 = arith.constant 0 : index
    %c0_11 = arith.constant 0 : index
    %11 = vector.load %arg7[%c0_10, %c0_11] : memref<1x32xf32, #tpu.memory_space<vmem>>, vector<1x32xf32>
    %12 = vector.broadcast %11 : vector<1x32xf32> to vector<8x32xf32>
    %13 = arith.addf %10, %12 : vector<8x32xf32>
    %cst_12 = arith.constant 0.000000e+00 : f32
    %14 = vector.broadcast %cst_12 : f32 to vector<8x32xf32>
    %15 = arith.maximumf %13, %14 : vector<8x32xf32>
    %c0_13 = arith.constant 0 : index
    %c0_14 = arith.constant 0 : index
    %16 = vector.load %arg8[%c0_13, %c0_14] : memref<32x128xf32, #tpu.memory_space<vmem>>, vector<32x128xf32>
    %cst_15 = arith.constant dense<0.000000e+00> : vector<8x128xf32>
    %17 = tpu.matmul %15, %16, %cst_15 {dimension_numbers = #tpu.dot_dimension_numbers<[1], [0], [0], [1], [0, 0, 1, 1], [], []>} : vector<8x32xf32>, vector<32x128xf32>, vector<8x128xf32> -> vector<8x128xf32>
    %c0_16 = arith.constant 0 : index
    %c0_17 = arith.constant 0 : index
    %18 = vector.load %arg9[%c0_16, %c0_17] : memref<8x128xf32, #tpu.memory_space<vmem>>, vector<8x128xf32>
    %19 = arith.addf %17, %18 : vector<8x128xf32>
    %c0_18 = arith.constant 0 : index
    %c0_19 = arith.constant 0 : index
    %c0_20 = arith.constant 0 : index
    %20 = vector.load %arg10[%c0_18, %c0_19, %c0_20] : memref<1x1x128xf32, #tpu.memory_space<vmem>>, vector<1x1x128xf32>
    %21 = vector.shape_cast %20 : vector<1x1x128xf32> to vector<1x128xf32>
    %22 = vector.broadcast %21 : vector<1x128xf32> to vector<8x128xf32>
    %23 = arith.addf %19, %22 : vector<8x128xf32>
    %cst_21 = arith.constant 0.000000e+00 : f32
    %24 = vector.broadcast %cst_21 : f32 to vector<8x128xf32>
    %25 = arith.maximumf %23, %24 : vector<8x128xf32>
    %c0_22 = arith.constant 0 : index
    %c0_23 = arith.constant 0 : index
    %c0_24 = arith.constant 0 : index
    %26 = vector.load %arg11[%c0_22, %c0_23, %c0_24] : memref<1x8x128xf32, #tpu.memory_space<vmem>>, vector<1x8x128xf32>
    %27 = vector.shape_cast %26 : vector<1x8x128xf32> to vector<8x128xf32>
    %28 = vector.shape_cast %25 : vector<8x128xf32> to vector<1x8x128xf32>
    tpu.vector_store %arg11[%c0_22, %c0_23, %c0_24], %28 {strides = array<i32>} : memref<1x8x128xf32, #tpu.memory_space<vmem>>, vector<1x8x128xf32>,
    return
  }
  func.func @transform_0(%arg0: i32, %arg1: i32, %arg2: memref<1xi32, #tpu.memory_space<smem>>) -> (i32, i32, i32) {
    %c0_i32 = arith.constant 0 : i32
    %c0_i32_0 = arith.constant 0 : i32
    return %arg1, %arg0, %c0_i32 : i32, i32, i32
  }
  func.func @transform_1(%arg0: i32, %arg1: i32, %arg2: memref<1xi32, #tpu.memory_space<smem>>) -> (i32, i32) {
    %c0_i32 = arith.constant 0 : i32
    %c0_i32_0 = arith.constant 0 : i32
    %c0_i32_1 = arith.constant 0 : i32
    return %c0_i32, %c0_i32_0 : i32, i32
  }
  func.func @transform_2(%arg0: i32, %arg1: i32, %arg2: memref<1xi32, #tpu.memory_space<smem>>) -> (i32, i32) {
    %c0_i32 = arith.constant 0 : i32
    %c0_i32_0 = arith.constant 0 : i32
    %c0_i32_1 = arith.constant 0 : i32
    return %c0_i32, %c0_i32_0 : i32, i32
  }
  func.func @transform_3(%arg0: i32, %arg1: i32, %arg2: memref<1xi32, #tpu.memory_space<smem>>) -> (i32, i32) {
    %c0_i32 = arith.constant 0 : i32
    %c0_i32_0 = arith.constant 0 : i32
    %c0_i32_1 = arith.constant 0 : i32
    return %c0_i32, %c0_i32_0 : i32, i32
  }
  func.func @transform_4(%arg0: i32, %arg1: i32, %arg2: memref<1xi32, #tpu.memory_space<smem>>) -> (i32, i32) {
    %c0_i32 = arith.constant 0 : i32
    %c0_i32_0 = arith.constant 0 : i32
    %c0_i32_1 = arith.constant 0 : i32
    return %c0_i32, %c0_i32_0 : i32, i32
  }
  func.func @transform_5(%arg0: i32, %arg1: i32, %arg2: memref<1xi32, #tpu.memory_space<smem>>) -> (i32, i32) {
    %c0_i32 = arith.constant 0 : i32
    %c0_i32_0 = arith.constant 0 : i32
    %c0_i32_1 = arith.constant 0 : i32
    return %c0_i32, %c0_i32_0 : i32, i32
  }
  func.func @transform_6(%arg0: i32, %arg1: i32, %arg2: memref<1xi32, #tpu.memory_space<smem>>) -> (i32, i32) {
    %c0_i32 = arith.constant 0 : i32
    %c0_i32_0 = arith.constant 0 : i32
    return %arg0, %c0_i32 : i32, i32
  }
  func.func @transform_7(%arg0: i32, %arg1: i32, %arg2: memref<1xi32, #tpu.memory_space<smem>>) -> (i32, i32, i32) {
    %c0_i32 = arith.constant 0 : i32
    %c0_i32_0 = arith.constant 0 : i32
    %c0_i32_1 = arith.constant 0 : i32
    return %arg1, %c0_i32, %c0_i32_0 : i32, i32, i32
  }
  func.func @transform_8(%arg0: i32, %arg1: i32, %arg2: memref<1xi32, #tpu.memory_space<smem>>) -> (i32, i32, i32) {
    %c0_i32 = arith.constant 0 : i32
    %c0_i32_0 = arith.constant 0 : i32
    return %arg1, %arg0, %c0_i32 : i32, i32, i32
  }
}

</mosaic_0001>

<llo_original>
// kernel: tpu_custom_call.1
$region0: #{tpu_custom_call.1}
  #allocation0 [shape = 'u32[]', space=smem, size = 0x4, offset = 0x4, fixed_abs, tag = 'smem constant byte address 0x4 - core index']
  #allocation1 [shape = 'u32[144,128]{1,0:T(1,128)}', space=vmem, size = 0x12000, scoped, tag = 'internal scratch']
  #allocation2 [shape = 's32[1]{0}', space=sflag, size = 0x4, scoped, tag = 'scoped memory for tpu_custom_call.1']
  #allocation3 [shape = 's32[1]{0:T(128)S(6)}', space=smem, size = 0x200, scoped, tag = 'prefetched SMEM operand 0']
  %s0 = inlined_call_operand.<no memory space> [shape: s32[1], index: 0, kind: input, shape index: {}]
  %s1 = inlined_call_operand.hbm [shape: f32[2,8,8], index: 1, kind: input, shape index: {}]
  %s2 = inlined_call_operand.hbm [shape: f32[8,32], index: 2, kind: input, shape index: {}]
  %s3 = inlined_call_operand.vmem [shape: f32[1,32], index: 3, kind: input, shape index: {}]
  %s4 = inlined_call_operand.hbm [shape: f32[32,32], index: 4, kind: input, shape index: {}]
  %s5 = inlined_call_operand.vmem [shape: f32[1,32], index: 5, kind: input, shape index: {}]
  %s6 = inlined_call_operand.hbm [shape: f32[32,128], index: 6, kind: input, shape index: {}]
  %s7 = inlined_call_operand.vmem [shape: f32[8,128], index: 7, kind: input, shape index: {}]
  %s8 = inlined_call_operand.vmem [shape: f32[2,1,128], index: 8, kind: input, shape index: {}]
  %s9 = inlined_call_operand.hbm [shape: f32[2,8,128], index: 9, kind: output, shape index: {}]
  %s10 = sld [smem:[#allocation0]]
  $region81: #{tpu_custom_call.1} parent=0
    _
  %s12 = ssub.s32 1, %s10
  %s13 = scalar_select 0, %s12, %s10
  %14 = sst [smem:[#allocation3]] %s0
  $region1: #{tpu_custom_call.1} parent=0
    #allocation4 [shape = 'u8[8192]{0}', space=vmem, size = 0x2000, scoped, tag = 'input window, operand 1']
    #allocation5 [shape = 's32[2]{0}', space=sflag, size = 0x8, scoped, tag = 'scoped memory for tpu_custom_call.1']
    #allocation6 [shape = 's32[2]{0}', space=sflag, size = 0x8, scoped, tag = 'scoped memory for tpu_custom_call.1']
    #allocation7 [shape = 'u8[4096]{0}', space=vmem, size = 0x1000, scoped, tag = 'input window, operand 2, single buffered']
    #allocation8 [shape = 's32[1]{0}', space=sflag, size = 0x4, scoped, tag = 'scoped memory for tpu_custom_call.1']
    #allocation9 [shape = 'u8[16384]{0}', space=vmem, size = 0x4000, scoped, tag = 'input window, operand 4, single buffered']
    #allocation10 [shape = 'u8[16384]{0}', space=vmem, size = 0x4000, scoped, tag = 'input window, operand 6, single buffered']
    #allocation11 [shape = 's32[1]{0}', space=sflag, size = 0x4, scoped, tag = 'scoped memory for tpu_custom_call.1']
    #allocation12 [shape = 'u8[8192]{0}', space=vmem, size = 0x2000, scoped, tag = 'output window, operand 0']
    %15 = vsyncpa [#allocation5], 0
    %s16 = scalar_lea.sflag [#allocation5], 1
    %17 = vsyncpa %s16, 0
    %18 = vsyncpa [#allocation8], 0
    %19 = vsyncpa [#allocation11], 0
    %20 = vsyncpa [#allocation6], 0
    %s21 = scalar_lea.sflag [#allocation6], 1
    %22 = vsyncpa %s21, 0
    loop: start=0, step=1, limit=4
    $region2: #{tpu_custom_call.1} parent=1 // loop_pre_header
      _
    $region3: #{tpu_custom_call.1} parent=1 // loop_header
      %s24 = sphi 0, %s28
      %p25 = scmp.ge.s32.totalorder %s24, 4
      %s31 = sphi 0, %s43
      %s32 = sphi 0, %s39
      %s33 = sphi 0, %s31
      %s34 = sphi 0, %s32
      %s35 = sphi 0, %s33
      %s36 = sphi 0, %s34
      %s48 = sphi 0, %s50
      %s51 = sphi 0, %s48
      %s52 = sphi 0, %s51
      %s68 = sphi 0, %s52
      %s72 = sphi 0, %s72
      %s74 = sphi 0, %s72
      %s75 = sphi 0, %s74
      %s89 = sphi 0, %s75
      %s93 = sphi 0, %s93
      %s95 = sphi 0, %s93
      %s96 = sphi 0, %s95
      %s110 = sphi 0, %s96
      %s114 = sphi 0, %s114
      %s116 = sphi 0, %s114
      %s117 = sphi 0, %s116
      %s131 = sphi 0, %s117
      %s135 = sphi 0, %s135
      %s137 = sphi 0, %s135
      %s138 = sphi 0, %s137
      %s152 = sphi 0, %s138
      %s156 = sphi 0, %s156
      %s158 = sphi 0, %s156
      %s159 = sphi 0, %s158
      %s173 = sphi 0, %s159
      %s179 = sphi 0, %s181
      %s182 = sphi 0, %s179
      %s183 = sphi 0, %s182
      %s199 = sphi 0, %s183
      %s205 = sphi 0, %s207
      %s208 = sphi 0, %s205
      %s209 = sphi 0, %s208
      %s225 = sphi 0, %s209
      %s233 = sphi 0, %s235
      %s236 = sphi 0, %s233
      %s237 = sphi 0, %s236
      %s253 = sphi 0, %s237
    $region4: #{tpu_custom_call.1} parent=1 // loop_header_branch
      %27 = sbr.rel (%p25) target = $region8
    $region5: #{tpu_custom_call.1} parent=1 // loop_body
      %s29 = ssub.s32 %s24, 1
      %s30 = ssub.s32 %s24, 2
      %s37 = sadd.s32 1, %s32
      %p38 = scmp.ge.s32.totalorder %s37, 2
      %s39 = scalar_select %p38, 0, %s37
      %s40 = sadd.s32 1, %s31
      %s41 = scalar_select %p38, %s40, %s31
      %p42 = scmp.ge.s32.totalorder %s41, 1
      %s43 = scalar_select %p42, 0, %s41
      %s44 = ssub.s32 %s32, %s39
      %s45 = ssub.s32 %s31, %s43
      %s46 = sor.u32 %s44, %s45
      %p47 = scmp.eq.s32.totalorder %s46, 0
      %s49 = sadd.s32 %s48, 1
      %s50 = scalar_select %p47, %s48, %s49
      %p53 = pneg %p47
      %p54 = scmp.eq.s32.totalorder %s24, 1
      %p55 = por %p53, %p54
      %p56 = scmp.ne.s32.totalorder %s48, %s51
      %p57 = scmp.eq.s32.totalorder %s24, 0
      %p58 = por %p56, %p57
      %p59 = scmp.ne.s32.totalorder %s48, %s51
      %p60 = scmp.eq.s32.totalorder %s29, 1
      %p61 = por %p59, %p60
      %p62 = scmp.ne.s32.totalorder %s51, %s52
      %p63 = scmp.eq.s32.totalorder %s29, 0
      %p64 = por %p62, %p63
      %p65 = scmp.ne.s32.totalorder %s51, %s52
      %p66 = scmp.eq.s32.totalorder %s30, 1
      %p67 = por %p65, %p66
      %p69 = scmp.ne.s32.totalorder %s52, %s68
      %p70 = scmp.eq.s32.totalorder %s30, 0
      %p71 = por %p69, %p70
      %s73 = sadd.s32 %s72, 1
      %p76 = scmp.eq.s32.totalorder %s24, 1
      %p77 = scmp.ne.s32.totalorder %s72, %s74
      %p78 = scmp.eq.s32.totalorder %s24, 0
      %p79 = por %p77, %p78
      %p80 = scmp.ne.s32.totalorder %s72, %s74
      %p81 = scmp.eq.s32.totalorder %s29, 1
      %p82 = por %p80, %p81
      %p83 = scmp.ne.s32.totalorder %s74, %s75
      %p84 = scmp.eq.s32.totalorder %s29, 0
      %p85 = por %p83, %p84
      %p86 = scmp.ne.s32.totalorder %s74, %s75
      %p87 = scmp.eq.s32.totalorder %s30, 1
      %p88 = por %p86, %p87
      %p90 = scmp.ne.s32.totalorder %s75, %s89
      %p91 = scmp.eq.s32.totalorder %s30, 0
      %p92 = por %p90, %p91
      %s94 = sadd.s32 %s93, 1
      %p97 = scmp.eq.s32.totalorder %s24, 1
      %p98 = scmp.ne.s32.totalorder %s93, %s95
      %p99 = scmp.eq.s32.totalorder %s24, 0
      %p100 = por %p98, %p99
      %p101 = scmp.ne.s32.totalorder %s93, %s95
      %p102 = scmp.eq.s32.totalorder %s29, 1
      %p103 = por %p101, %p102
      %p104 = scmp.ne.s32.totalorder %s95, %s96
      %p105 = scmp.eq.s32.totalorder %s29, 0
      %p106 = por %p104, %p105
      %p107 = scmp.ne.s32.totalorder %s95, %s96
      %p108 = scmp.eq.s32.totalorder %s30, 1
      %p109 = por %p107, %p108
      %p111 = scmp.ne.s32.totalorder %s96, %s110
      %p112 = scmp.eq.s32.totalorder %s30, 0
      %p113 = por %p111, %p112
      %s115 = sadd.s32 %s114, 1
      %p118 = scmp.eq.s32.totalorder %s24, 1
      %p119 = scmp.ne.s32.totalorder %s114, %s116
      %p120 = scmp.eq.s32.totalorder %s24, 0
      %p121 = por %p119, %p120
      %p122 = scmp.ne.s32.totalorder %s114, %s116
      %p123 = scmp.eq.s32.totalorder %s29, 1
      %p124 = por %p122, %p123
      %p125 = scmp.ne.s32.totalorder %s116, %s117
      %p126 = scmp.eq.s32.totalorder %s29, 0
      %p127 = por %p125, %p126
      %p128 = scmp.ne.s32.totalorder %s116, %s117
      %p129 = scmp.eq.s32.totalorder %s30, 1
      %p130 = por %p128, %p129
      %p132 = scmp.ne.s32.totalorder %s117, %s131
      %p133 = scmp.eq.s32.totalorder %s30, 0
      %p134 = por %p132, %p133
      %s136 = sadd.s32 %s135, 1
      %p139 = scmp.eq.s32.totalorder %s24, 1
      %p140 = scmp.ne.s32.totalorder %s135, %s137
      %p141 = scmp.eq.s32.totalorder %s24, 0
      %p142 = por %p140, %p141
      %p143 = scmp.ne.s32.totalorder %s135, %s137
      %p144 = scmp.eq.s32.totalorder %s29, 1
      %p145 = por %p143, %p144
      %p146 = scmp.ne.s32.totalorder %s137, %s138
      %p147 = scmp.eq.s32.totalorder %s29, 0
      %p148 = por %p146, %p147
      %p149 = scmp.ne.s32.totalorder %s137, %s138
      %p150 = scmp.eq.s32.totalorder %s30, 1
      %p151 = por %p149, %p150
      %p153 = scmp.ne.s32.totalorder %s138, %s152
      %p154 = scmp.eq.s32.totalorder %s30, 0
      %p155 = por %p153, %p154
      %s157 = sadd.s32 %s156, 1
      %p160 = scmp.eq.s32.totalorder %s24, 1
      %p161 = scmp.ne.s32.totalorder %s156, %s158
      %p162 = scmp.eq.s32.totalorder %s24, 0
      %p163 = por %p161, %p162
      %p164 = scmp.ne.s32.totalorder %s156, %s158
      %p165 = scmp.eq.s32.totalorder %s29, 1
      %p166 = por %p164, %p165
      %p167 = scmp.ne.s32.totalorder %s158, %s159
      %p168 = scmp.eq.s32.totalorder %s29, 0
      %p169 = por %p167, %p168
      %p170 = scmp.ne.s32.totalorder %s158, %s159
      %p171 = scmp.eq.s32.totalorder %s30, 1
      %p172 = por %p170, %p171
      %p174 = scmp.ne.s32.totalorder %s159, %s173
      %p175 = scmp.eq.s32.totalorder %s30, 0
      %p176 = por %p174, %p175
      %s177 = ssub.s32 %s31, %s43
      %p178 = scmp.eq.s32.totalorder %s177, 0
      %s180 = sadd.s32 %s179, 1
      %s181 = scalar_select %p178, %s179, %s180
      %p184 = pneg %p178
      %p185 = scmp.eq.s32.totalorder %s24, 1
      %p186 = por %p184, %p185
      %p187 = scmp.ne.s32.totalorder %s179, %s182
      %p188 = scmp.eq.s32.totalorder %s24, 0
      %p189 = por %p187, %p188
      %p190 = scmp.ne.s32.totalorder %s179, %s182
      %p191 = scmp.eq.s32.totalorder %s29, 1
      %p192 = por %p190, %p191
      %p193 = scmp.ne.s32.totalorder %s182, %s183
      %p194 = scmp.eq.s32.totalorder %s29, 0
      %p195 = por %p193, %p194
      %p196 = scmp.ne.s32.totalorder %s182, %s183
      %p197 = scmp.eq.s32.totalorder %s30, 1
      %p198 = por %p196, %p197
      %p200 = scmp.ne.s32.totalorder %s183, %s199
      %p201 = scmp.eq.s32.totalorder %s30, 0
      %p202 = por %p200, %p201
      %s203 = ssub.s32 %s32, %s39
      %p204 = scmp.eq.s32.totalorder %s203, 0
      %s206 = sadd.s32 %s205, 1
      %s207 = scalar_select %p204, %s205, %s206
      %p210 = pneg %p204
      %p211 = scmp.eq.s32.totalorder %s24, 1
      %p212 = por %p210, %p211
      %p213 = scmp.ne.s32.totalorder %s205, %s208
      %p214 = scmp.eq.s32.totalorder %s24, 0
      %p215 = por %p213, %p214
      %p216 = scmp.ne.s32.totalorder %s205, %s208
      %p217 = scmp.eq.s32.totalorder %s29, 1
      %p218 = por %p216, %p217
      %p219 = scmp.ne.s32.totalorder %s208, %s209
      %p220 = scmp.eq.s32.totalorder %s29, 0
      %p221 = por %p219, %p220
      %p222 = scmp.ne.s32.totalorder %s208, %s209
      %p223 = scmp.eq.s32.totalorder %s30, 1
      %p224 = por %p222, %p223
      %p226 = scmp.ne.s32.totalorder %s209, %s225
      %p227 = scmp.eq.s32.totalorder %s30, 0
      %p228 = por %p226, %p227
      %s229 = ssub.s32 %s32, %s39
      %s230 = ssub.s32 %s31, %s43
      %s231 = sor.u32 %s229, %s230
      %p232 = scmp.eq.s32.totalorder %s231, 0
      %s234 = sadd.s32 %s233, 1
      %s235 = scalar_select %p232, %s233, %s234
      %p238 = pneg %p232
      %p239 = scmp.eq.s32.totalorder %s24, 1
      %p240 = por %p238, %p239
      %p241 = scmp.ne.s32.totalorder %s233, %s236
      %p242 = scmp.eq.s32.totalorder %s24, 0
      %p243 = por %p241, %p242
      %p244 = scmp.ne.s32.totalorder %s233, %s236
      %p245 = scmp.eq.s32.totalorder %s29, 1
      %p246 = por %p244, %p245
      %p247 = scmp.ne.s32.totalorder %s236, %s237
      %p248 = scmp.eq.s32.totalorder %s29, 0
      %p249 = por %p247, %p248
      %p250 = scmp.ne.s32.totalorder %s236, %s237
      %p251 = scmp.eq.s32.totalorder %s30, 1
      %p252 = por %p250, %p251
      %p254 = scmp.ne.s32.totalorder %s237, %s253
      %p255 = scmp.eq.s32.totalorder %s30, 0
      %p256 = por %p254, %p255
      %p257 = scmp.le.s32.totalorder 1, %s24
      %p258 = scmp.lt.s32.totalorder %s24, 3
      %p259 = pnand %p257, %p258
      %p260 = pneg %p259
      // Predicated region
      $region9: #{tpu_custom_call.1} parent=5 // pred_check
        _
      $region10: #{tpu_custom_call.1} parent=5 // pred_check_branch
        %262 = sbr.rel (%p259) target = $region12
      $region11: #{tpu_custom_call.1} parent=5 // pred_region
        %s263 = ssub.s32 %s24, 1
        // Predicated region
        $region13: #{tpu_custom_call.1} parent=11 // pred_check
          %p264 = pneg %p85
        $region14: #{tpu_custom_call.1} parent=11 // pred_check_branch
          %266 = sbr.rel (%p264) target = $region16
        $region15: #{tpu_custom_call.1} parent=11 // pred_region
          %s268 = ssub.s32 128, 128
          %269 = vsyncadd [#allocation8], %s268
          %s271 = sshll.u32 [#allocation7], 4
          %s272 = int_to_ptr.vmem [resolvable:$true] %s271
          %274 = dma.hbm_to_vmem [thread:$0]  %s2, 128, %s272, [#allocation8]
        $region16: #{tpu_custom_call.1} parent=11 // pred_fallthru
          _
        // Predicated region
        $region17: #{tpu_custom_call.1} parent=11 // pred_check
          %p275 = pneg %p106
        $region18: #{tpu_custom_call.1} parent=11 // pred_check_branch
          %277 = sbr.rel (%p275) target = $region20
        $region19: #{tpu_custom_call.1} parent=11 // pred_region
          _
        $region20: #{tpu_custom_call.1} parent=11 // pred_fallthru
          _
        // Predicated region
        $region21: #{tpu_custom_call.1} parent=11 // pred_check
          %p278 = pneg %p127
        $region22: #{tpu_custom_call.1} parent=11 // pred_check_branch
          %280 = sbr.rel (%p278) target = $region24
        $region23: #{tpu_custom_call.1} parent=11 // pred_region
          %s282 = ssub.s32 512, 512
          %283 = vsyncadd [#allocation8], %s282
          %s284 = sshll.u32 [#allocation9], 4
          %s285 = int_to_ptr.vmem [resolvable:$true] %s284
          %290 = dma.hbm_to_vmem [thread:$0]  %s4, 512, %s285, [#allocation8], 128, 128, 8
        $region24: #{tpu_custom_call.1} parent=11 // pred_fallthru
          _
        // Predicated region
        $region25: #{tpu_custom_call.1} parent=11 // pred_check
          %p291 = pneg %p148
        $region26: #{tpu_custom_call.1} parent=11 // pred_check_branch
          %293 = sbr.rel (%p291) target = $region28
        $region27: #{tpu_custom_call.1} parent=11 // pred_region
          _
        $region28: #{tpu_custom_call.1} parent=11 // pred_fallthru
          _
        // Predicated region
        $region29: #{tpu_custom_call.1} parent=11 // pred_check
          %p294 = pneg %p169
        $region30: #{tpu_custom_call.1} parent=11 // pred_check_branch
          %296 = sbr.rel (%p294) target = $region32
        $region31: #{tpu_custom_call.1} parent=11 // pred_region
          %s298 = ssub.s32 512, 512
          %299 = vsyncadd [#allocation11], %s298
          %s300 = sshll.u32 [#allocation10], 4
          %s301 = int_to_ptr.vmem [resolvable:$true] %s300
          %306 = dma.hbm_to_vmem [thread:$0]  %s6, 512, %s301, [#allocation11], 128, 128, 8
        $region32: #{tpu_custom_call.1} parent=11 // pred_fallthru
          _
        // Predicated region
        $region33: #{tpu_custom_call.1} parent=11 // pred_check
          %p307 = pneg %p195
        $region34: #{tpu_custom_call.1} parent=11 // pred_check_branch
          %309 = sbr.rel (%p307) target = $region36
        $region35: #{tpu_custom_call.1} parent=11 // pred_region
          %p310 = scmp.lt.s32.totalorder %s33, 0
          %s311 = scalar_select %p310, %s33, 0
          %s312 = smul.addr %s311, 8
          %s313 = scalar_lea.vmem %s7, %s312
        $region36: #{tpu_custom_call.1} parent=11 // pred_fallthru
          _
      $region12: #{tpu_custom_call.1} parent=5 // pred_fallthru
        _
      %p314 = scmp.lt.s32.totalorder %s24, 2
      // Predicated region
      $region37: #{tpu_custom_call.1} parent=5 // pred_check
        %p315 = pneg %p314
      $region38: #{tpu_custom_call.1} parent=5 // pred_check_branch
        %317 = sbr.rel (%p315) target = $region40
      $region39: #{tpu_custom_call.1} parent=5 // pred_region
        // Predicated region
        $region41: #{tpu_custom_call.1} parent=39 // pred_check
          %p318 = pneg %p58
        $region42: #{tpu_custom_call.1} parent=39 // pred_check_branch
          %320 = sbr.rel (%p318) target = $region44
        $region43: #{tpu_custom_call.1} parent=39 // pred_region
          %s321 = sand.u32 %s48, 1
          %s322 = scalar_lea.sflag [#allocation5], %s321
          %s323 = sand.u32 %s48, 1
          %s324 = smul.addr %s323, 8
          %s325 = scalar_lea.vmem [#allocation4], %s324
          %s327 = ssub.s32 128, 128
          %328 = vsyncadd %s322, %s327
          %s329 = sadd.s32 %s31, %s32
          %s330 = smul.addr %s329, 128
          %s331 = scalar_lea.hbm %s1, %s330
          %s333 = sshll.u32 %s325, 4
          %s334 = int_to_ptr.vmem [resolvable:$true] %s333
          %336 = dma.hbm_to_vmem [thread:$0]  %s331, 128, %s334, %s322
        $region44: #{tpu_custom_call.1} parent=39 // pred_fallthru
          _
        // Predicated region
        $region45: #{tpu_custom_call.1} parent=39 // pred_check
          %p337 = pneg %p215
        $region46: #{tpu_custom_call.1} parent=39 // pred_check_branch
          %339 = sbr.rel (%p337) target = $region48
        $region47: #{tpu_custom_call.1} parent=39 // pred_region
          %p340 = scmp.lt.s32.totalorder %s32, 1
          %s341 = scalar_select %p340, %s32, 1
          %s342 = scalar_lea.vmem %s8, %s341
        $region48: #{tpu_custom_call.1} parent=39 // pred_fallthru
          _
      $region40: #{tpu_custom_call.1} parent=5 // pred_fallthru
        _
      %p343 = scmp.le.s32.totalorder 1, %s24
      %p344 = scmp.lt.s32.totalorder %s24, 3
      %p345 = pnand %p343, %p344
      %p346 = pneg %p345
      // Predicated region
      $region49: #{tpu_custom_call.1} parent=5 // pred_check
        _
      $region50: #{tpu_custom_call.1} parent=5 // pred_check_branch
        %348 = sbr.rel (%p345) target = $region52
      $region51: #{tpu_custom_call.1} parent=5 // pred_region
        %s349 = ssub.s32 %s24, 1
        %s350 = sand.u32 %s51, 1
        %s351 = scalar_lea.sflag [#allocation5], %s350
        %s352 = sand.u32 %s51, 1
        %s353 = smul.addr %s352, 8
        %s354 = scalar_lea.vmem [#allocation4], %s353
        // Predicated region
        $region53: #{tpu_custom_call.1} parent=51 // pred_check
          %p355 = pneg %p64
        $region54: #{tpu_custom_call.1} parent=51 // pred_check_branch
          %357 = sbr.rel (%p355) target = $region56
        $region55: #{tpu_custom_call.1} parent=51 // pred_region
          %358 = dma.done %s351, 128
        $region56: #{tpu_custom_call.1} parent=51 // pred_fallthru
          _
        // Predicated region
        $region57: #{tpu_custom_call.1} parent=51 // pred_check
          %p359 = pneg %p85
        $region58: #{tpu_custom_call.1} parent=51 // pred_check_branch
          %361 = sbr.rel (%p359) target = $region60
        $region59: #{tpu_custom_call.1} parent=51 // pred_region
          %362 = dma.done [#allocation8], 128
        $region60: #{tpu_custom_call.1} parent=51 // pred_fallthru
          _
        // Predicated region
        $region61: #{tpu_custom_call.1} parent=51 // pred_check
          %p363 = pneg %p127
        $region62: #{tpu_custom_call.1} parent=51 // pred_check_branch
          %365 = sbr.rel (%p363) target = $region64
        $region63: #{tpu_custom_call.1} parent=51 // pred_region
          %366 = dma.done [#allocation8], 512
        $region64: #{tpu_custom_call.1} parent=51 // pred_fallthru
          _
        // Predicated region
        $region65: #{tpu_custom_call.1} parent=51 // pred_check
          %p367 = pneg %p169
        $region66: #{tpu_custom_call.1} parent=51 // pred_check_branch
          %369 = sbr.rel (%p367) target = $region68
        $region67: #{tpu_custom_call.1} parent=51 // pred_region
          %370 = dma.done [#allocation11], 512
        $region68: #{tpu_custom_call.1} parent=51 // pred_fallthru
          _
        %s371 = sand.u32 %s51, 1
        %s372 = scalar_lea.sflag [#allocation5], %s371
        %s373 = sand.u32 %s51, 1
        %s374 = smul.addr %s373, 8
        %s375 = scalar_lea.vmem [#allocation4], %s374
        %p376 = pneg %p64
        %p377 = pneg %p61
        %p378 = pneg %p85
        %p379 = pneg %p82
        %p380 = pneg %p106
        %p381 = pneg %p103
        %p382 = pneg %p127
        %p383 = pneg %p124
        %p384 = pneg %p148
        %p385 = pneg %p145
        %p386 = pneg %p169
        %p387 = pneg %p166
        %p388 = scmp.lt.s32.totalorder %s33, 0
        %s389 = scalar_select %p388, %s33, 0
        %s390 = smul.addr %s389, 8
        %s391 = scalar_lea.vmem %s7, %s390
        %p392 = pneg %p195
        %p393 = pneg %p192
        %p394 = scmp.lt.s32.totalorder %s34, 1
        %s395 = scalar_select %p394, %s34, 1
        %s396 = scalar_lea.vmem %s8, %s395
        %p397 = pneg %p221
        %p398 = pneg %p218
        %p399 = pneg %p249
        %p400 = pneg %p246
        %s401 = sand.u32 %s236, 1
        %s402 = scalar_lea.sflag [#allocation6], %s401
        %s403 = sand.u32 %s236, 1
        %s404 = smul.addr %s403, 8
        %s405 = scalar_lea.vmem [#allocation12], %s404
        %p406 = scmp.lt.s32.totalorder %s33, 0
        %s407 = scalar_select %p406, %s33, 0
        %s408 = smul.addr %s407, 8
        %s409 = scalar_lea.vmem %s7, %s408
        %p410 = scmp.lt.s32.totalorder %s34, 1
        %s411 = scalar_select %p410, %s34, 1
        %s412 = scalar_lea.vmem %s8, %s411
        %v413 = vld [vmem:[%s354] sm:$0xff]
        %v414 = vld [vmem:[#allocation7] sm:$0xff]
        %v415 = vld [vmem:[%s3] sm:$0x1]
        %v417 = vlaneseq
        %v418 = vshrl.u32 %v417, 7
        %v419 = vsub.s32 0, %v418
        %v420 = vrot.slane %v415, %v419
        %vm422 = vcmask 64512
        %v424 = vsel %vm422, %v413, 0
        %426 = vmatprep.subr.mxu0 0.0
        %427 = vmatpush1.msra.mxu0 %v414
        %428 = vmatprep.subr.mxu0 0.0
        %429 = vmatpush1.msra.mxu0 0.0
        %430 = vmatprep.subr.mxu0 0.0
        %431 = vmatpush1.msra.mxu0 0.0
        %432 = vmatprep.subr.mxu0 0.0
        %433 = vmatpush1.msra.mxu0 0.0
        %434 = vmatprep.subr.mxu0 0.0
        %435 = vmatpush1.msra.mxu0 0.0
        %436 = vmatprep.subr.mxu0 0.0
        %437 = vmatpush1.msra.mxu0 0.0
        %438 = vmatprep.subr.mxu0 0.0
        %439 = vmatpush1.msra.mxu0 0.0
        %440 = vmatprep.subr.mxu0 0.0
        %441 = vmatpush1.msra.mxu0 0.0
        %442 = vmatprep.subr.mxu0 0.0
        %443 = vmatpush1.msra.mxu0 0.0
        %444 = vmatprep.subr.mxu0 0.0
        %445 = vmatpush1.msra.mxu0 0.0
        %446 = vmatprep.subr.mxu0 0.0
        %447 = vmatpush1.msra.mxu0 0.0
        %448 = vmatprep.subr.mxu0 0.0
        %449 = vmatpush1.msra.mxu0 0.0
        %450 = vmatprep.subr.mxu0 0.0
        %451 = vmatpush1.msra.mxu0 0.0
        %452 = vmatprep.subr.mxu0 0.0
        %453 = vmatpush1.msra.mxu0 0.0
        %454 = vmatprep.subr.mxu0 0.0
        %455 = vmatpush1.msra.mxu0 0.0
        %456 = vmatprep.subr.mxu0 0.0
        %457 = vmatpush1.msra.mxu0 0.0
        %458 = vmatprep.subr.mxu0 0.0
        %459 = vmatpush1.msra.mxu0 0.0
        %460 = vmatprep.subr.mxu0 0.0
        %461 = vmatpush1.msra.mxu0 0.0
        %462 = vmatprep.subr.mxu0 0.0
        %463 = vmatpush1.msra.mxu0 0.0
        %464 = vmatprep.subr.mxu0 0.0
        %465 = vmatpush1.msra.mxu0 0.0
        %466 = vmatprep.subr.mxu0 0.0
        %467 = vmatpush1.msra.mxu0 0.0
        %468 = vmatprep.subr.mxu0 0.0
        %469 = vmatpush1.msra.mxu0 0.0
        %470 = vmatprep.subr.mxu0 0.0
        %471 = vmatpush1.msra.mxu0 0.0
        %472 = vmatprep.subr.mxu0 0.0
        %473 = vmatpush1.msra.mxu0 0.0
        %474 = vmatprep.subr.mxu0 0.0
        %475 = vmatpush1.msra.mxu0 0.0
        %476 = vmatprep.subr.mxu0 0.0
        %477 = vmatpush1.msra.mxu0 0.0
        %478 = vmatprep.subr.mxu0 0.0
        %479 = vmatpush1.msra.mxu0 0.0
        %480 = vmatprep.subr.mxu0 0.0
        %481 = vmatpush1.msra.mxu0 0.0
        %482 = vmatprep.subr.mxu0 0.0
        %483 = vmatpush1.msra.mxu0 0.0
        %484 = vmatprep.subr.mxu0 0.0
        %485 = vmatpush1.msra.mxu0 0.0
        %486 = vmatprep.subr.mxu0 0.0
        %487 = vmatpush1.msra.mxu0 0.0
        %488 = vmatprep.subr.mxu0 0.0
        %489 = vmatpush1.msra.mxu0 0.0
        %490 = vmatprep.mubr.f32.mxu0 0.0
        %491 = vmatmul.mubr.f32.gmra.mrb[0].mxu0 %v424
        %v492 = vpop.f32.mrb[0].mxu0
        %v493 = vadd.f32 %v420, %v492
        %v494 = vpop.f32.mrb[0].mxu0
        %495 = vdwg.mxu0
        %v496 = vmax.f32 %v493, 0.0
        %v497 = vld [vmem:[#allocation9] sm:$0xff]
        %v498 = vld [vmem:[#allocation9 + $0x8] sm:$0xff]
        %v499 = vld [vmem:[#allocation9 + $0x10] sm:$0xff]
        %v500 = vld [vmem:[#allocation9 + $0x18] sm:$0xff]
        %v501 = vld [vmem:[%s5] sm:$0x1]
        %v503 = vlaneseq
        %v504 = vshrl.u32 %v503, 7
        %v505 = vsub.s32 0, %v504
        %v506 = vrot.slane %v501, %v505
        %vm508 = vcmask 261120
        %v510 = vsel %vm508, %v496, 0
        %512 = vmatprep.subr.mxu0 0.0
        %513 = vmatpush1.msra.mxu0 %v497
        %514 = vmatprep.subr.mxu0 0.0
        %515 = vmatpush1.msra.mxu0 %v498
        %516 = vmatprep.subr.mxu0 0.0
        %517 = vmatpush1.msra.mxu0 %v499
        %518 = vmatprep.subr.mxu0 0.0
        %519 = vmatpush1.msra.mxu0 %v500
        %520 = vmatprep.subr.mxu0 0.0
        %521 = vmatpush1.msra.mxu0 0.0
        %522 = vmatprep.subr.mxu0 0.0
        %523 = vmatpush1.msra.mxu0 0.0
        %524 = vmatprep.subr.mxu0 0.0
        %525 = vmatpush1.msra.mxu0 0.0
        %526 = vmatprep.subr.mxu0 0.0
        %527 = vmatpush1.msra.mxu0 0.0
        %528 = vmatprep.subr.mxu0 0.0
        %529 = vmatpush1.msra.mxu0 0.0
        %530 = vmatprep.subr.mxu0 0.0
        %531 = vmatpush1.msra.mxu0 0.0
        %532 = vmatprep.subr.mxu0 0.0
        %533 = vmatpush1.msra.mxu0 0.0
        %534 = vmatprep.subr.mxu0 0.0
        %535 = vmatpush1.msra.mxu0 0.0
        %536 = vmatprep.subr.mxu0 0.0
        %537 = vmatpush1.msra.mxu0 0.0
        %538 = vmatprep.subr.mxu0 0.0
        %539 = vmatpush1.msra.mxu0 0.0
        %540 = vmatprep.subr.mxu0 0.0
        %541 = vmatpush1.msra.mxu0 0.0
        %542 = vmatprep.subr.mxu0 0.0
        %543 = vmatpush1.msra.mxu0 0.0
        %544 = vmatprep.subr.mxu0 0.0
        %545 = vmatpush1.msra.mxu0 0.0
        %546 = vmatprep.subr.mxu0 0.0
        %547 = vmatpush1.msra.mxu0 0.0
        %548 = vmatprep.subr.mxu0 0.0
        %549 = vmatpush1.msra.mxu0 0.0
        %550 = vmatprep.subr.mxu0 0.0
        %551 = vmatpush1.msra.mxu0 0.0
        %552 = vmatprep.subr.mxu0 0.0
        %553 = vmatpush1.msra.mxu0 0.0
        %554 = vmatprep.subr.mxu0 0.0
        %555 = vmatpush1.msra.mxu0 0.0
        %556 = vmatprep.subr.mxu0 0.0
        %557 = vmatpush1.msra.mxu0 0.0
        %558 = vmatprep.subr.mxu0 0.0
        %559 = vmatpush1.msra.mxu0 0.0
        %560 = vmatprep.subr.mxu0 0.0
        %561 = vmatpush1.msra.mxu0 0.0
        %562 = vmatprep.subr.mxu0 0.0
        %563 = vmatpush1.msra.mxu0 0.0
        %564 = vmatprep.subr.mxu0 0.0
        %565 = vmatpush1.msra.mxu0 0.0
        %566 = vmatprep.subr.mxu0 0.0
        %567 = vmatpush1.msra.mxu0 0.0
        %568 = vmatprep.subr.mxu0 0.0
        %569 = vmatpush1.msra.mxu0 0.0
        %570 = vmatprep.subr.mxu0 0.0
        %571 = vmatpush1.msra.mxu0 0.0
        %572 = vmatprep.subr.mxu0 0.0
        %573 = vmatpush1.msra.mxu0 0.0
        %574 = vmatprep.subr.mxu0 0.0
        %575 = vmatpush1.msra.mxu0 0.0
        %576 = vmatprep.mubr.f32.mxu0 0.0
        %577 = vmatmul.mubr.f32.gmra.mrb[0].mxu0 %v510
        %v578 = vpop.f32.mrb[0].mxu0
        %v579 = vadd.f32 %v506, %v578
        %v580 = vpop.f32.mrb[0].mxu0
        %581 = vdwg.mxu0
        %v582 = vmax.f32 %v579, 0.0
        %v583 = vld [vmem:[#allocation10] sm:$0xff]
        %v584 = vld [vmem:[#allocation10 + $0x8] sm:$0xff]
        %v585 = vld [vmem:[#allocation10 + $0x10] sm:$0xff]
        %v586 = vld [vmem:[#allocation10 + $0x18] sm:$0xff]
        %v587 = vld [vmem:[%s409] sm:$0xff]
        %v589 = vsel %vm508, %v582, 0
        %591 = vmatprep.subr.mxu0 0.0
        %592 = vmatpush1.msra.mxu0 %v583
        %593 = vmatprep.subr.mxu0 0.0
        %594 = vmatpush1.msra.mxu0 %v584
        %595 = vmatprep.subr.mxu0 0.0
        %596 = vmatpush1.msra.mxu0 %v585
        %597 = vmatprep.subr.mxu0 0.0
        %598 = vmatpush1.msra.mxu0 %v586
        %599 = vmatprep.subr.mxu0 0.0
        %600 = vmatpush1.msra.mxu0 0.0
        %601 = vmatprep.subr.mxu0 0.0
        %602 = vmatpush1.msra.mxu0 0.0
        %603 = vmatprep.subr.mxu0 0.0
        %604 = vmatpush1.msra.mxu0 0.0
        %605 = vmatprep.subr.mxu0 0.0
        %606 = vmatpush1.msra.mxu0 0.0
        %607 = vmatprep.subr.mxu0 0.0
        %608 = vmatpush1.msra.mxu0 0.0
        %609 = vmatprep.subr.mxu0 0.0
        %610 = vmatpush1.msra.mxu0 0.0
        %611 = vmatprep.subr.mxu0 0.0
        %612 = vmatpush1.msra.mxu0 0.0
        %613 = vmatprep.subr.mxu0 0.0
        %614 = vmatpush1.msra.mxu0 0.0
        %615 = vmatprep.subr.mxu0 0.0
        %616 = vmatpush1.msra.mxu0 0.0
        %617 = vmatprep.subr.mxu0 0.0
        %618 = vmatpush1.msra.mxu0 0.0
        %619 = vmatprep.subr.mxu0 0.0
        %620 = vmatpush1.msra.mxu0 0.0
        %621 = vmatprep.subr.mxu0 0.0
        %622 = vmatpush1.msra.mxu0 0.0
        %623 = vmatprep.subr.mxu0 0.0
        %624 = vmatpush1.msra.mxu0 0.0
        %625 = vmatprep.subr.mxu0 0.0
        %626 = vmatpush1.msra.mxu0 0.0
        %627 = vmatprep.subr.mxu0 0.0
        %628 = vmatpush1.msra.mxu0 0.0
        %629 = vmatprep.subr.mxu0 0.0
        %630 = vmatpush1.msra.mxu0 0.0
        %631 = vmatprep.subr.mxu0 0.0
        %632 = vmatpush1.msra.mxu0 0.0
        %633 = vmatprep.subr.mxu0 0.0
        %634 = vmatpush1.msra.mxu0 0.0
        %635 = vmatprep.subr.mxu0 0.0
        %636 = vmatpush1.msra.mxu0 0.0
        %637 = vmatprep.subr.mxu0 0.0
        %638 = vmatpush1.msra.mxu0 0.0
        %639 = vmatprep.subr.mxu0 0.0
        %640 = vmatpush1.msra.mxu0 0.0
        %641 = vmatprep.subr.mxu0 0.0
        %642 = vmatpush1.msra.mxu0 0.0
        %643 = vmatprep.subr.mxu0 0.0
        %644 = vmatpush1.msra.mxu0 0.0
        %645 = vmatprep.subr.mxu0 0.0
        %646 = vmatpush1.msra.mxu0 0.0
        %647 = vmatprep.subr.mxu0 0.0
        %648 = vmatpush1.msra.mxu0 0.0
        %649 = vmatprep.subr.mxu0 0.0
        %650 = vmatpush1.msra.mxu0 0.0
        %651 = vmatprep.subr.mxu0 0.0
        %652 = vmatpush1.msra.mxu0 0.0
        %653 = vmatprep.subr.mxu0 0.0
        %654 = vmatpush1.msra.mxu0 0.0
        %655 = vmatprep.mubr.f32.mxu0 0.0
        %656 = vmatmul.mubr.f32.gmra.mrb[0].mxu0 %v589
        %v657 = vpop.f32.mrb[0].mxu0
        %v658 = vadd.f32 %v587, %v657
        %v659 = vpop.f32.mrb[0].mxu0
        %660 = vdwg.mxu0
        %v661 = vld [vmem:[%s412] sm:$0x1]
        %v663 = vlaneseq
        %v664 = vshrl.u32 %v663, 7
        %v665 = vsub.s32 0, %v664
        %v666 = vrot.slane %v661, %v665
        %v668 = vadd.f32 %v658, %v666
        %v669 = vmax.f32 %v668, 0.0
        %670 = vst [vmem:[%s405] sm:$0xff] %v669
        %s671 = sand.u32 %s236, 1
        %s672 = scalar_lea.sflag [#allocation6], %s671
        %s673 = sand.u32 %s236, 1
        %s674 = smul.addr %s673, 8
        %s675 = scalar_lea.vmem [#allocation12], %s674
        // Predicated region
        $region69: #{tpu_custom_call.1} parent=51 // pred_check
          %p676 = pneg %p246
        $region70: #{tpu_custom_call.1} parent=51 // pred_check_branch
          %678 = sbr.rel (%p676) target = $region72
        $region71: #{tpu_custom_call.1} parent=51 // pred_region
          %s680 = ssub.s32 128, 128
          %681 = vsyncadd %s672, %s680
          %s682 = sadd.s32 %s33, %s34
          %s683 = smul.addr %s682, 128
          %s684 = scalar_lea.hbm %s9, %s683
          %s686 = sshll.u32 %s675, 4
          %s687 = int_to_ptr.vmem [resolvable:$true] %s686
          %689 = dma.vmem_to_hbm [thread:$0]  %s687, 128, %s684, %s672
        $region72: #{tpu_custom_call.1} parent=51 // pred_fallthru
          _
      $region52: #{tpu_custom_call.1} parent=5 // pred_fallthru
        _
      %p690 = scmp.le.s32.totalorder 2, %s24
      // Predicated region
      $region73: #{tpu_custom_call.1} parent=5 // pred_check
        %p691 = pneg %p690
      $region74: #{tpu_custom_call.1} parent=5 // pred_check_branch
        %693 = sbr.rel (%p691) target = $region76
      $region75: #{tpu_custom_call.1} parent=5 // pred_region
        %s694 = ssub.s32 %s24, 2
        // Predicated region
        $region77: #{tpu_custom_call.1} parent=75 // pred_check
          %p695 = pneg %p252
        $region78: #{tpu_custom_call.1} parent=75 // pred_check_branch
          %697 = sbr.rel (%p695) target = $region80
        $region79: #{tpu_custom_call.1} parent=75 // pred_region
          %s698 = sand.u32 %s237, 1
          %s699 = scalar_lea.sflag [#allocation6], %s698
          %s700 = sand.u32 %s237, 1
          %s701 = smul.addr %s700, 8
          %s702 = scalar_lea.vmem [#allocation12], %s701
          %703 = dma.done %s699, 128
        $region80: #{tpu_custom_call.1} parent=75 // pred_fallthru
          _
      $region76: #{tpu_custom_call.1} parent=5 // pred_fallthru
        _
    $region6: #{tpu_custom_call.1} parent=1 // loop_footer
      %s28 = sadd.s32 1, %s24
    $region7: #{tpu_custom_call.1} parent=1 // loop_footer_branch
      %23 = sbr.rel target = $region3
    $region8: #{tpu_custom_call.1} parent=1 // loop_exit
      _
    %704 = vsyncpa [#allocation5], 1
    %s705 = scalar_lea.sflag [#allocation5], 1
    %706 = vsyncpa %s705, 1
    %707 = vsyncpa [#allocation8], 1
    %708 = vsyncpa [#allocation11], 1
    %709 = vsyncpa [#allocation6], 1
    %s710 = scalar_lea.sflag [#allocation6], 1
    %711 = vsyncpa %s710, 1

</llo_original>
